<compile_context>
chip_gen: v7x
topology: tpu7x:2x2x1
jax: 0.10.0
libtpu: 0.0.40
codegen_flags: <defaults>
</compile_context>

<pallas_src>
import functools

import jax
import jax.numpy as jnp
from jax.experimental import pallas as pl
from jax.experimental.pallas import tpu as pltpu


def _round_up(x, m):
    return (x + m - 1) // m * m


def _vmem_capacity_bytes():
    try:
        return int(pltpu.get_tpu_info().vmem_capacity_bytes)
    except Exception:
        return 128 * 1024 * 1024


def _vmem_estimate(row_tile, ff_tile, D, act_isz, w_isz, n_k):
    """Working-set estimate (double-buffered tiles + f32 intermediates)."""
    est = (2 * row_tile * D * act_isz           # x tile (double-buffered)
           + 2 * row_tile * D * act_isz         # out tile (double-buffered)
           + 2 * D * ff_tile * w_isz            # W1 slab
           + 2 * ff_tile * D * w_isz            # W2 slab
           + 2 * ff_tile * w_isz                # b1 slab
           + 2 * 3 * D * 4                      # b2 / gamma / beta
           + row_tile * ff_tile * 4             # f32 h intermediate
           + 3 * row_tile * D * 4)              # f32 epilogue temporaries
    if n_k > 1:
        est += row_tile * D * 4                 # f32 accumulator scratch
    return est


def _choose_tiles(rows, D, d_ff, act_isz, w_isz, budget, row_tile, ff_tile):
    """Pick (row_tile, ff_tile).  Prefers weight-resident (ff_tile == d_ff)."""
    if row_tile is not None:
        row_cands = [row_tile]
    elif rows <= 1024:
        # single row tile, minimal padding (multiple of 8 sublanes)
        row_cands = [_round_up(max(rows, 1), 8)]
    else:
        cands = (1024, 512, 256, 128)
        scored = sorted((_round_up(rows, c) - rows, -c, c) for c in cands)
        row_cands = [c for _, _, c in scored]   # minimal padding, prefer large

    if ff_tile is not None:
        return row_cands[0], ff_tile

    if d_ff % 128 == 0:
        ft_cands = [c for c in range(d_ff, 0, -128) if d_ff % c == 0]
    else:
        ft_cands = [d_ff]                        # cannot tile cleanly on lanes

    # Pass 1: weight residency (ff_tile == d_ff -> W1/W2 DMA'd exactly once).
    for rt in row_cands:
        if _vmem_estimate(rt, d_ff, D, act_isz, w_isz, 1) <= budget:
            return rt, d_ff
    # Pass 2: streamed weights; large row tile amortizes the refetch.
    for rt in row_cands:
        for ft in ft_cands:
            if _vmem_estimate(rt, ft, D, act_isz, w_isz, d_ff // ft) <= budget:
                return rt, ft
    return row_cands[-1], ft_cands[-1]


def _layernorm(z, gamma, beta, eps):
    mean = jnp.mean(z, axis=-1, keepdims=True)
    centered = z - mean
    var = jnp.mean(centered * centered, axis=-1, keepdims=True)
    inv_std = jax.lax.rsqrt(var + eps)
    return centered * (inv_std * gamma) + beta


def _ffn_kernel_fused(x_ref, w1_ref, b1_ref, w2_ref, b2_ref,
                      gamma_ref, beta_ref, o_ref, *, eps, matmul_dtype):
    """ff_tile == d_ff: weights resident, no reduction axis, no acc scratch."""
    x = x_ref[...]
    h = jnp.dot(x.astype(matmul_dtype), w1_ref[...],
                preferred_element_type=jnp.float32)
    h = jnp.maximum(h + b1_ref[...].astype(jnp.float32), 0.0)
    y = jnp.dot(h.astype(matmul_dtype), w2_ref[...],
                preferred_element_type=jnp.float32)
    z = y + b2_ref[...].astype(jnp.float32) + x.astype(jnp.float32)
    out = _layernorm(z, gamma_ref[...].astype(jnp.float32),
                     beta_ref[...].astype(jnp.float32), eps)
    o_ref[...] = out.astype(o_ref.dtype)


def _ffn_kernel_acc(x_ref, w1_ref, b1_ref, w2_ref, b2_ref,
                    gamma_ref, beta_ref, o_ref, acc_ref, *, eps, matmul_dtype):
    """Tiled d_ff reduction path with an f32 accumulator scratch."""
    k = pl.program_id(1)
    x = x_ref[...]

    @pl.when(k == 0)
    def _():
        # Seed with bias2 (instead of zeros) so the epilogue skips that add.
        acc_ref[...] = jnp.broadcast_to(
            b2_ref[...].astype(jnp.float32), acc_ref.shape)

    h = jnp.dot(x.astype(matmul_dtype), w1_ref[...],
                preferred_element_type=jnp.float32)
    h = jnp.maximum(h + b1_ref[...].astype(jnp.float32), 0.0)
    acc_ref[...] += jnp.dot(h.astype(matmul_dtype), w2_ref[...],
                            preferred_element_type=jnp.float32)

    @pl.when(k == pl.num_programs(1) - 1)
    def _():
        z = acc_ref[...] + x.astype(jnp.float32)
        out = _layernorm(z, gamma_ref[...].astype(jnp.float32),
                         beta_ref[...].astype(jnp.float32), eps)
        o_ref[...] = out.astype(o_ref.dtype)


def feed_forward_sublayer(x, w1, b1, w2, b2, gamma, beta,
                          *, eps=1e-5, row_tile=None, ff_tile=None,
                          matmul_dtype=None):
    """x: (batch, seq, d_model). Weights stored (in, out) so kernel does x @ W.

    matmul_dtype: dtype fed to the MXU (default = x.dtype).  bf16 inputs run
    the MXU natively in bf16; pass jnp.bfloat16 to opt f32 inputs into mixed
    precision (f32 accumulation + f32 epilogue are kept either way).
    """
    B, S, D = x.shape
    d_ff = w1.shape[1]
    rows = B * S

    if matmul_dtype is None:
        matmul_dtype = x.dtype
    matmul_dtype = jnp.dtype(matmul_dtype)
    w1 = w1.astype(matmul_dtype)
    w2 = w2.astype(matmul_dtype)

    act_isz = jnp.dtype(x.dtype).itemsize
    w_isz = matmul_dtype.itemsize

    vmem_cap = _vmem_capacity_bytes()
    # ~80% of physical VMEM, capped at 100 MiB: ~100 MiB on v5e/v6e (128 MiB
    # physical), ~51 MiB on v7x (64 MiB per TC) -> headroom for compiler scratch.
    vmem_budget = min(int(0.8 * vmem_cap), 100 * 1024 * 1024)

    row_tile, ff_tile = _choose_tiles(rows, D, d_ff, act_isz, w_isz,
                                      vmem_budget, row_tile, ff_tile)
    assert d_ff % ff_tile == 0, "ff_tile must divide d_ff"

    rows_p = _round_up(rows, row_tile)
    x2d = x.reshape(rows, D)
    if rows_p != rows:
        x2d = jnp.pad(x2d, ((0, rows_p - rows), (0, 0)))

    n_row = rows_p // row_tile
    n_k = d_ff // ff_tile

    b1_2d = b1.reshape(1, d_ff)
    b2_2d = b2.reshape(1, D)
    g_2d = gamma.reshape(1, D)
    bt_2d = beta.reshape(1, D)

    # Cost estimate: weights are read once when resident, n_row times otherwise.
    flops = 4 * rows_p * D * d_ff
    weight_fetches = 1 if n_k == 1 else n_row
    bytes_accessed = int(2 * rows_p * D * act_isz
                         + weight_fetches * (2 * D * d_ff + d_ff) * w_isz
                         + 3 * D * 4)
    cost = pl.CostEstimate(flops=flops, transcendentals=rows_p,
                           bytes_accessed=bytes_accessed)

    vmem_est = _vmem_estimate(row_tile, ff_tile, D, act_isz, w_isz, n_k)
    vmem_limit = int(min(max(32 * 1024 * 1024, int(1.25 * vmem_est),
                             vmem_budget),
                         128 * 1024 * 1024))

    if n_k == 1:
        kernel = functools.partial(_ffn_kernel_fused, eps=eps,
                                   matmul_dtype=matmul_dtype)
        grid = (n_row,)
        in_specs = [
            pl.BlockSpec((row_tile, D), lambda i: (i, 0)),    # x rows tile
            pl.BlockSpec((D, d_ff), lambda i: (0, 0)),        # W1 (resident)
            pl.BlockSpec((1, d_ff), lambda i: (0, 0)),        # b1
            pl.BlockSpec((d_ff, D), lambda i: (0, 0)),        # W2 (resident)
            pl.BlockSpec((1, D), lambda i: (0, 0)),           # b2
            pl.BlockSpec((1, D), lambda i: (0, 0)),           # gamma
            pl.BlockSpec((1, D), lambda i: (0, 0)),           # beta
        ]
        out_specs = pl.BlockSpec((row_tile, D), lambda i: (i, 0))
        scratch = []
        dims = ("parallel",)
    else:
        kernel = functools.partial(_ffn_kernel_acc, eps=eps,
                                   matmul_dtype=matmul_dtype)
        grid = (n_row, n_k)
        in_specs = [
            pl.BlockSpec((row_tile, D), lambda i, k: (i, 0)),  # x rows tile
            pl.BlockSpec((D, ff_tile), lambda i, k: (0, k)),   # W1 slab
            pl.BlockSpec((1, ff_tile), lambda i, k: (0, k)),   # b1 slab
            pl.BlockSpec((ff_tile, D), lambda i, k: (k, 0)),   # W2 slab
            pl.BlockSpec((1, D), lambda i, k: (0, 0)),         # b2
            pl.BlockSpec((1, D), lambda i, k: (0, 0)),         # gamma
            pl.BlockSpec((1, D), lambda i, k: (0, 0)),         # beta
        ]
        out_specs = pl.BlockSpec((row_tile, D), lambda i, k: (i, 0))
        scratch = [pltpu.VMEM((row_tile, D), jnp.float32)]
        dims = ("parallel", "arbitrary")

    out2d = pl.pallas_call(
        kernel,
        out_shape=jax.ShapeDtypeStruct((rows_p, D), x.dtype),
        grid_spec=pltpu.PrefetchScalarGridSpec(
            num_scalar_prefetch=0,
            grid=grid,
            in_specs=in_specs,
            out_specs=out_specs,
            scratch_shapes=scratch),
        compiler_params=pltpu.CompilerParams(
            dimension_semantics=dims,
            vmem_limit_bytes=vmem_limit),
        cost_estimate=cost,
    )(x2d, w1, b1_2d, w2, b2_2d, g_2d, bt_2d)

    if rows_p != rows:
        out2d = out2d[:rows]
    return out2d.reshape(B, S, D)


def init_params(key, d_model, d_ff):
    """Deterministic init mimicking nn.Linear / nn.LayerNorm defaults."""
    k1, k2, k3, k4 = jax.random.split(key, 4)
    bound1 = 1.0 / (d_model ** 0.5)
    bound2 = 1.0 / (d_ff ** 0.5)
    # store weights as (in_features, out_features) so the kernel computes x @ W
    w1 = jax.random.uniform(k1, (d_model, d_ff), jnp.float32, -bound1, bound1)
    b1 = jax.random.uniform(k2, (d_ff,), jnp.float32, -bound1, bound1)
    w2 = jax.random.uniform(k3, (d_ff, d_model), jnp.float32, -bound2, bound2)
    b2 = jax.random.uniform(k4, (d_model,), jnp.float32, -bound2, bound2)
    gamma = jnp.ones((d_model,), jnp.float32)
    beta = jnp.zeros((d_model,), jnp.float32)
    return w1, b1, w2, b2, gamma, beta


def reference(x, w1, b1, w2, b2, gamma, beta, eps=1e-5):
    """Pure-JAX f32 reference of the PyTorch forward (eval-mode dropout)."""
    f32 = jnp.float32
    x, w1, b1 = x.astype(f32), w1.astype(f32), b1.astype(f32)
    w2, b2 = w2.astype(f32), b2.astype(f32)
    gamma, beta = gamma.astype(f32), beta.astype(f32)
    h = jnp.maximum(x @ w1 + b1, 0.0)
    y = h @ w2 + b2
    z = x + y
    mean = jnp.mean(z, -1, keepdims=True)
    var = jnp.mean((z - mean) ** 2, -1, keepdims=True)
    return (z - mean) / jnp.sqrt(var + eps) * gamma + beta


if __name__ == "__main__":
    key = jax.random.PRNGKey(0)
    kx, kp, kx2, kp2 = jax.random.split(key, 4)

    # --- Test 1: small f32, weight-resident single-k path (exact math) ------
    batch, seq, d_model, d_ff = 2, 8, 32, 64
    x = jax.random.normal(kx, (batch, seq, d_model), jnp.float32)
    params = init_params(kp, d_model, d_ff)

    out = jax.block_until_ready(feed_forward_sublayer(x, *params))
    ref = reference(x, *params)
    assert out.shape == (batch, seq, d_model)
    assert jnp.allclose(out, ref, atol=1e-5, rtol=1e-5), "f32 fused mismatch"

    # --- Test 2: f32, forced d_ff-reduction path + row padding (rows=300) ---
    b2_, s2_, dm2, dff2 = 3, 100, 128, 512
    x2 = jax.random.normal(kx2, (b2_, s2_, dm2), jnp.float32)
    params2 = init_params(kp2, dm2, dff2)
    out2 = jax.block_until_ready(
        feed_forward_sublayer(x2, *params2, ff_tile=128))
    ref2 = reference(x2, *params2)
    assert out2.shape == (b2_, s2_, dm2)
    assert jnp.allclose(out2, ref2, atol=1e-4, rtol=1e-4), "acc-path mismatch"

    # --- Test 3: bf16 activations/weights -> native bf16 MXU path -----------
    xb = x2.astype(jnp.bfloat16)
    paramsb = tuple(p.astype(jnp.bfloat16) for p in params2)
    outb = jax.block_until_ready(feed_forward_sublayer(xb, *paramsb))
    refb = reference(xb, *paramsb)
    assert outb.dtype == jnp.bfloat16
    assert jnp.allclose(outb.astype(jnp.float32), refb,
                        atol=7.5e-2, rtol=5e-2), "bf16 path mismatch"

    print("KERNEL_OK")
</pallas_src>

<mosaic_0001>
module attributes {stable_mosaic.version = 11 : i64} {
  func.func @_ffn_kernel_fused(%arg0: i32, %arg1: memref<16x32xf32, #tpu.memory_space<vmem>>, %arg2: memref<32x64xf32, #tpu.memory_space<vmem>>, %arg3: memref<1x64xf32, #tpu.memory_space<vmem>>, %arg4: memref<64x32xf32, #tpu.memory_space<vmem>>, %arg5: memref<1x32xf32, #tpu.memory_space<vmem>>, %arg6: memref<1x32xf32, #tpu.memory_space<vmem>>, %arg7: memref<1x32xf32, #tpu.memory_space<vmem>>, %arg8: memref<16x32xf32, #tpu.memory_space<vmem>>) attributes {dimension_semantics = [#tpu.dimension_semantics<parallel>], iteration_bounds = array<i64: 1>, scalar_prefetch = 0 : i64, scratch_operands = 0 : i64, tpu.core_type = #tpu.core_type<tc>, window_params = [{transform_indices = @transform_0, window_bounds = array<i64: 16, 32>}, {pipeline_mode = #tpu.pipeline_mode<synchronous>, transform_indices = @transform_1, window_bounds = array<i64: 32, 64>}, {pipeline_mode = #tpu.pipeline_mode<synchronous>, transform_indices = @transform_2, window_bounds = array<i64: 1, 64>}, {pipeline_mode = #tpu.pipeline_mode<synchronous>, transform_indices = @transform_3, window_bounds = array<i64: 64, 32>}, {pipeline_mode = #tpu.pipeline_mode<synchronous>, transform_indices = @transform_4, window_bounds = array<i64: 1, 32>}, {pipeline_mode = #tpu.pipeline_mode<synchronous>, transform_indices = @transform_5, window_bounds = array<i64: 1, 32>}, {pipeline_mode = #tpu.pipeline_mode<synchronous>, transform_indices = @transform_6, window_bounds = array<i64: 1, 32>}, {transform_indices = @transform_7, window_bounds = array<i64: 16, 32>}]} {
    %c0 = arith.constant 0 : index
    %c0_0 = arith.constant 0 : index
    %0 = vector.load %arg1[%c0, %c0_0] : memref<16x32xf32, #tpu.memory_space<vmem>>, vector<16x32xf32>
    %c0_1 = arith.constant 0 : index
    %c0_2 = arith.constant 0 : index
    %1 = vector.load %arg2[%c0_1, %c0_2] : memref<32x64xf32, #tpu.memory_space<vmem>>, vector<32x64xf32>
    %cst = arith.constant dense<0.000000e+00> : vector<16x64xf32>
    %2 = tpu.matmul %0, %1, %cst {dimension_numbers = #tpu.dot_dimension_numbers<[1], [0], [0], [1], [0, 0, 1, 1], [], []>} : vector<16x32xf32>, vector<32x64xf32>, vector<16x64xf32> -> vector<16x64xf32>
    %c0_3 = arith.constant 0 : index
    %c0_4 = arith.constant 0 : index
    %3 = vector.load %arg3[%c0_3, %c0_4] : memref<1x64xf32, #tpu.memory_space<vmem>>, vector<1x64xf32>
    %4 = vector.broadcast %3 : vector<1x64xf32> to vector<16x64xf32>
    %5 = arith.addf %2, %4 : vector<16x64xf32>
    %cst_5 = arith.constant 0.000000e+00 : f32
    %6 = vector.broadcast %cst_5 : f32 to vector<16x64xf32>
    %7 = arith.maximumf %5, %6 : vector<16x64xf32>
    %c0_6 = arith.constant 0 : index
    %c0_7 = arith.constant 0 : index
    %8 = vector.load %arg4[%c0_6, %c0_7] : memref<64x32xf32, #tpu.memory_space<vmem>>, vector<64x32xf32>
    %cst_8 = arith.constant dense<0.000000e+00> : vector<16x32xf32>
    %9 = tpu.matmul %7, %8, %cst_8 {dimension_numbers = #tpu.dot_dimension_numbers<[1], [0], [0], [1], [0, 0, 1, 1], [], []>} : vector<16x64xf32>, vector<64x32xf32>, vector<16x32xf32> -> vector<16x32xf32>
    %c0_9 = arith.constant 0 : index
    %c0_10 = arith.constant 0 : index
    %10 = vector.load %arg5[%c0_9, %c0_10] : memref<1x32xf32, #tpu.memory_space<vmem>>, vector<1x32xf32>
    %11 = vector.broadcast %10 : vector<1x32xf32> to vector<16x32xf32>
    %12 = arith.addf %9, %11 : vector<16x32xf32>
    %13 = arith.addf %12, %0 : vector<16x32xf32>
    %c0_11 = arith.constant 0 : index
    %c0_12 = arith.constant 0 : index
    %14 = vector.load %arg6[%c0_11, %c0_12] : memref<1x32xf32, #tpu.memory_space<vmem>>, vector<1x32xf32>
    %c0_13 = arith.constant 0 : index
    %c0_14 = arith.constant 0 : index
    %15 = vector.load %arg7[%c0_13, %c0_14] : memref<1x32xf32, #tpu.memory_space<vmem>>, vector<1x32xf32>
    %cst_15 = arith.constant dense<0.000000e+00> : vector<16xf32>
    %16 = vector.multi_reduction <add>, %13, %cst_15 [1] : vector<16x32xf32> to vector<16xf32>
    %17 = vector.shape_cast %16 : vector<16xf32> to vector<16x1xf32>
    %cst_16 = arith.constant 3.200000e+01 : f32
    %18 = vector.broadcast %cst_16 : f32 to vector<16x1xf32>
    %19 = arith.divf %17, %18 : vector<16x1xf32>
    %20 = vector.broadcast %19 : vector<16x1xf32> to vector<16x32xf32>
    %21 = arith.subf %13, %20 : vector<16x32xf32>
    %22 = arith.mulf %21, %21 : vector<16x32xf32>
    %cst_17 = arith.constant dense<0.000000e+00> : vector<16xf32>
    %23 = vector.multi_reduction <add>, %22, %cst_17 [1] : vector<16x32xf32> to vector<16xf32>
    %24 = vector.shape_cast %23 : vector<16xf32> to vector<16x1xf32>
    %cst_18 = arith.constant 3.200000e+01 : f32
    %25 = vector.broadcast %cst_18 : f32 to vector<16x1xf32>
    %26 = arith.divf %24, %25 : vector<16x1xf32>
    %cst_19 = arith.constant 9.99999974E-6 : f32
    %27 = vector.broadcast %cst_19 : f32 to vector<16x1xf32>
    %28 = arith.addf %26, %27 : vector<16x1xf32>
    %29 = math.rsqrt %28 : vector<16x1xf32>
    %30 = vector.broadcast %29 : vector<16x1xf32> to vector<16x32xf32>
    %31 = vector.broadcast %14 : vector<1x32xf32> to vector<16x32xf32>
    %32 = arith.mulf %30, %31 : vector<16x32xf32>
    %33 = arith.mulf %21, %32 : vector<16x32xf32>
    %34 = vector.broadcast %15 : vector<1x32xf32> to vector<16x32xf32>
    %35 = arith.addf %33, %34 : vector<16x32xf32>
    %c0_20 = arith.constant 0 : index
    %c0_21 = arith.constant 0 : index
    %36 = vector.load %arg8[%c0_20, %c0_21] : memref<16x32xf32, #tpu.memory_space<vmem>>, vector<16x32xf32>
    tpu.vector_store %arg8[%c0_20, %c0_21], %35 {strides = array<i32>} : memref<16x32xf32, #tpu.memory_space<vmem>>, vector<16x32xf32>,
    return
  }
  func.func @transform_0(%arg0: i32) -> (i32, i32) {
    %c0_i32 = arith.constant 0 : i32
    %c0_i32_0 = arith.constant 0 : i32
    return %arg0, %c0_i32 : i32, i32
  }
  func.func @transform_1(%arg0: i32) -> (i32, i32) {
    %c0_i32 = arith.constant 0 : i32
    %c0_i32_0 = arith.constant 0 : i32
    %c0_i32_1 = arith.constant 0 : i32
    return %c0_i32, %c0_i32_0 : i32, i32
  }
  func.func @transform_2(%arg0: i32) -> (i32, i32) {
    %c0_i32 = arith.constant 0 : i32
    %c0_i32_0 = arith.constant 0 : i32
    %c0_i32_1 = arith.constant 0 : i32
    return %c0_i32, %c0_i32_0 : i32, i32
  }
  func.func @transform_3(%arg0: i32) -> (i32, i32) {
    %c0_i32 = arith.constant 0 : i32
    %c0_i32_0 = arith.constant 0 : i32
    %c0_i32_1 = arith.constant 0 : i32
    return %c0_i32, %c0_i32_0 : i32, i32
  }
  func.func @transform_4(%arg0: i32) -> (i32, i32) {
    %c0_i32 = arith.constant 0 : i32
    %c0_i32_0 = arith.constant 0 : i32
    %c0_i32_1 = arith.constant 0 : i32
    return %c0_i32, %c0_i32_0 : i32, i32
  }
  func.func @transform_5(%arg0: i32) -> (i32, i32) {
    %c0_i32 = arith.constant 0 : i32
    %c0_i32_0 = arith.constant 0 : i32
    %c0_i32_1 = arith.constant 0 : i32
    return %c0_i32, %c0_i32_0 : i32, i32
  }
  func.func @transform_6(%arg0: i32) -> (i32, i32) {
    %c0_i32 = arith.constant 0 : i32
    %c0_i32_0 = arith.constant 0 : i32
    %c0_i32_1 = arith.constant 0 : i32
    return %c0_i32, %c0_i32_0 : i32, i32
  }
  func.func @transform_7(%arg0: i32) -> (i32, i32) {
    %c0_i32 = arith.constant 0 : i32
    %c0_i32_0 = arith.constant 0 : i32
    return %arg0, %c0_i32 : i32, i32
  }
}

</mosaic_0001>

<llo_original>
// kernel: tpu_custom_call.1
$region0: #{tpu_custom_call.1}
  #allocation0 [shape = 'u32[]', space=smem, size = 0x4, offset = 0x4, fixed_abs, tag = 'smem constant byte address 0x4 - core index']
  #allocation1 [shape = 'u32[144,128]{1,0:T(1,128)}', space=vmem, size = 0x12000, scoped, tag = 'internal scratch']
  %s0 = inlined_call_operand.hbm [shape: f32[16,32], index: 0, kind: input, shape index: {}]
  %s1 = inlined_call_operand.hbm [shape: f32[32,64], index: 1, kind: input, shape index: {}]
  %s2 = inlined_call_operand.hbm [shape: f32[1,64], index: 2, kind: input, shape index: {}]
  %s3 = inlined_call_operand.hbm [shape: f32[64,32], index: 3, kind: input, shape index: {}]
  %s4 = inlined_call_operand.hbm [shape: f32[1,32], index: 4, kind: input, shape index: {}]
  %s5 = inlined_call_operand.hbm [shape: f32[1,32], index: 5, kind: input, shape index: {}]
  %s6 = inlined_call_operand.hbm [shape: f32[1,32], index: 6, kind: input, shape index: {}]
  %s7 = inlined_call_operand.hbm [shape: f32[16,32], index: 7, kind: output, shape index: {}]
  %s8 = sld [smem:[#allocation0]]
  $region66: #{tpu_custom_call.1} parent=0
    _
  %s10 = ssub.s32 1, %s8
  %s11 = scalar_select 0, %s10, %s8
  $region1: #{tpu_custom_call.1} parent=0
    #allocation2 [shape = 'u8[8192]{0}', space=vmem, size = 0x2000, scoped, tag = 'input window, operand 0, single buffered']
    #allocation3 [shape = 's32[1]{0}', space=sflag, size = 0x4, scoped, tag = 'scoped memory for tpu_custom_call.1']
    #allocation4 [shape = 's32[1]{0}', space=sflag, size = 0x4, scoped, tag = 'scoped memory for tpu_custom_call.1']
    #allocation5 [shape = 'u8[16384]{0}', space=vmem, size = 0x4000, scoped, tag = 'input window, operand 1, single buffered']
    #allocation6 [shape = 's32[1]{0}', space=sflag, size = 0x4, scoped, tag = 'scoped memory for tpu_custom_call.1']
    #allocation7 [shape = 'u8[512]{0}', space=vmem, size = 0x400, scoped, tag = 'input window, operand 2, single buffered']
    #allocation8 [shape = 'u8[32768]{0}', space=vmem, size = 0x8000, scoped, tag = 'input window, operand 3, single buffered']
    #allocation9 [shape = 's32[1]{0}', space=sflag, size = 0x4, scoped, tag = 'scoped memory for tpu_custom_call.1']
    #allocation10 [shape = 'u8[512]{0}', space=vmem, size = 0x400, scoped, tag = 'input window, operand 4, single buffered']
    #allocation11 [shape = 'u8[512]{0}', space=vmem, size = 0x400, scoped, tag = 'input window, operand 5, single buffered']
    #allocation12 [shape = 's32[1]{0}', space=sflag, size = 0x4, scoped, tag = 'scoped memory for tpu_custom_call.1']
    #allocation13 [shape = 'u8[512]{0}', space=vmem, size = 0x400, scoped, tag = 'input window, operand 6, single buffered']
    #allocation14 [shape = 'u8[8192]{0}', space=vmem, size = 0x2000, scoped, tag = 'output window, operand 0, single buffered']
    %12 = vsyncpa [#allocation3], 0
    %13 = vsyncpa [#allocation6], 0
    %14 = vsyncpa [#allocation9], 0
    %15 = vsyncpa [#allocation12], 0
    %16 = vsyncpa [#allocation4], 0
    // Predicated region
    $region2: #{tpu_custom_call.1} parent=1 // pred_check
      _
    $region3: #{tpu_custom_call.1} parent=1 // pred_check_branch
      %18 = sbr.rel (0) target = $region5
    $region4: #{tpu_custom_call.1} parent=1 // pred_region
      %s20 = ssub.s32 256, 256
      %21 = vsyncadd [#allocation3], %s20
      %s22 = sshll.u32 [#allocation2], 4
      %s23 = int_to_ptr.vmem [resolvable:$true] %s22
      %28 = dma.hbm_to_vmem [thread:$0]  %s0, 256, %s23, [#allocation3], 128, 128, 8
    $region5: #{tpu_custom_call.1} parent=1 // pred_fallthru
      _
    // Predicated region
    $region6: #{tpu_custom_call.1} parent=1 // pred_check
      _
    $region7: #{tpu_custom_call.1} parent=1 // pred_check_branch
      %30 = sbr.rel (0) target = $region9
    $region8: #{tpu_custom_call.1} parent=1 // pred_region
      %s32 = ssub.s32 512, 512
      %33 = vsyncadd [#allocation6], %s32
      %s34 = sshll.u32 [#allocation5], 4
      %s35 = int_to_ptr.vmem [resolvable:$true] %s34
      %40 = dma.hbm_to_vmem [thread:$0]  %s1, 512, %s35, [#allocation6], 128, 128, 8
    $region9: #{tpu_custom_call.1} parent=1 // pred_fallthru
      _
    // Predicated region
    $region10: #{tpu_custom_call.1} parent=1 // pred_check
      _
    $region11: #{tpu_custom_call.1} parent=1 // pred_check_branch
      %42 = sbr.rel (0) target = $region13
    $region12: #{tpu_custom_call.1} parent=1 // pred_region
      %s44 = ssub.s32 16, 16
      %45 = vsyncadd [#allocation6], %s44
      %s47 = sshll.u32 [#allocation7], 4
      %s48 = int_to_ptr.vmem [resolvable:$true] %s47
      %50 = dma.hbm_to_vmem [thread:$0]  %s2, 16, %s48, [#allocation6]
    $region13: #{tpu_custom_call.1} parent=1 // pred_fallthru
      _
    // Predicated region
    $region14: #{tpu_custom_call.1} parent=1 // pred_check
      _
    $region15: #{tpu_custom_call.1} parent=1 // pred_check_branch
      %52 = sbr.rel (0) target = $region17
    $region16: #{tpu_custom_call.1} parent=1 // pred_region
      %s54 = ssub.s32 1024, 1024
      %55 = vsyncadd [#allocation9], %s54
      %s56 = sshll.u32 [#allocation8], 4
      %s57 = int_to_ptr.vmem [resolvable:$true] %s56
      %62 = dma.hbm_to_vmem [thread:$0]  %s3, 1024, %s57, [#allocation9], 128, 128, 8
    $region17: #{tpu_custom_call.1} parent=1 // pred_fallthru
      _
    // Predicated region
    $region18: #{tpu_custom_call.1} parent=1 // pred_check
      _
    $region19: #{tpu_custom_call.1} parent=1 // pred_check_branch
      %64 = sbr.rel (0) target = $region21
    $region20: #{tpu_custom_call.1} parent=1 // pred_region
      %s66 = ssub.s32 16, 16
      %67 = vsyncadd [#allocation9], %s66
      %s69 = sshll.u32 [#allocation10], 4
      %s70 = int_to_ptr.vmem [resolvable:$true] %s69
      %72 = dma.hbm_to_vmem [thread:$0]  %s4, 16, %s70, [#allocation9]
    $region21: #{tpu_custom_call.1} parent=1 // pred_fallthru
      _
    // Predicated region
    $region22: #{tpu_custom_call.1} parent=1 // pred_check
      _
    $region23: #{tpu_custom_call.1} parent=1 // pred_check_branch
      %74 = sbr.rel (0) target = $region25
    $region24: #{tpu_custom_call.1} parent=1 // pred_region
      %s76 = ssub.s32 16, 16
      %77 = vsyncadd [#allocation12], %s76
      %s79 = sshll.u32 [#allocation11], 4
      %s80 = int_to_ptr.vmem [resolvable:$true] %s79
      %82 = dma.hbm_to_vmem [thread:$0]  %s5, 16, %s80, [#allocation12]
    $region25: #{tpu_custom_call.1} parent=1 // pred_fallthru
      _
    // Predicated region
    $region26: #{tpu_custom_call.1} parent=1 // pred_check
      _
    $region27: #{tpu_custom_call.1} parent=1 // pred_check_branch
      %84 = sbr.rel (0) target = $region29
    $region28: #{tpu_custom_call.1} parent=1 // pred_region
      %s86 = ssub.s32 16, 16
      %87 = vsyncadd [#allocation12], %s86
      %s89 = sshll.u32 [#allocation13], 4
      %s90 = int_to_ptr.vmem [resolvable:$true] %s89
      %92 = dma.hbm_to_vmem [thread:$0]  %s6, 16, %s90, [#allocation12]
    $region29: #{tpu_custom_call.1} parent=1 // pred_fallthru
      _
    // Predicated region
    $region30: #{tpu_custom_call.1} parent=1 // pred_check
      _
    $region31: #{tpu_custom_call.1} parent=1 // pred_check_branch
      %94 = sbr.rel (0) target = $region33
    $region32: #{tpu_custom_call.1} parent=1 // pred_region
      %95 = dma.done [#allocation3], 256
    $region33: #{tpu_custom_call.1} parent=1 // pred_fallthru
      _
    // Predicated region
    $region34: #{tpu_custom_call.1} parent=1 // pred_check
      _
    $region35: #{tpu_custom_call.1} parent=1 // pred_check_branch
      %97 = sbr.rel (0) target = $region37
    $region36: #{tpu_custom_call.1} parent=1 // pred_region
      %98 = dma.done [#allocation6], 512
    $region37: #{tpu_custom_call.1} parent=1 // pred_fallthru
      _
    // Predicated region
    $region38: #{tpu_custom_call.1} parent=1 // pred_check
      _
    $region39: #{tpu_custom_call.1} parent=1 // pred_check_branch
      %100 = sbr.rel (0) target = $region41
    $region40: #{tpu_custom_call.1} parent=1 // pred_region
      %101 = dma.done [#allocation6], 16
    $region41: #{tpu_custom_call.1} parent=1 // pred_fallthru
      _
    // Predicated region
    $region42: #{tpu_custom_call.1} parent=1 // pred_check
      _
    $region43: #{tpu_custom_call.1} parent=1 // pred_check_branch
      %103 = sbr.rel (0) target = $region45
    $region44: #{tpu_custom_call.1} parent=1 // pred_region
      %104 = dma.done [#allocation9], 1024
    $region45: #{tpu_custom_call.1} parent=1 // pred_fallthru
      _
    // Predicated region
    $region46: #{tpu_custom_call.1} parent=1 // pred_check
      _
    $region47: #{tpu_custom_call.1} parent=1 // pred_check_branch
      %106 = sbr.rel (0) target = $region49
    $region48: #{tpu_custom_call.1} parent=1 // pred_region
      %107 = dma.done [#allocation9], 16
    $region49: #{tpu_custom_call.1} parent=1 // pred_fallthru
      _
    // Predicated region
    $region50: #{tpu_custom_call.1} parent=1 // pred_check
      _
    $region51: #{tpu_custom_call.1} parent=1 // pred_check_branch
      %109 = sbr.rel (0) target = $region53
    $region52: #{tpu_custom_call.1} parent=1 // pred_region
      %110 = dma.done [#allocation12], 16
    $region53: #{tpu_custom_call.1} parent=1 // pred_fallthru
      _
    // Predicated region
    $region54: #{tpu_custom_call.1} parent=1 // pred_check
      _
    $region55: #{tpu_custom_call.1} parent=1 // pred_check_branch
      %112 = sbr.rel (0) target = $region57
    $region56: #{tpu_custom_call.1} parent=1 // pred_region
      %113 = dma.done [#allocation12], 16
    $region57: #{tpu_custom_call.1} parent=1 // pred_fallthru
      _
    %v114 = vld [vmem:[#allocation2] sm:$0xff]
    %v115 = vld [vmem:[#allocation2 + $0x8] sm:$0xff]
    %v116 = vld [vmem:[#allocation5] sm:$0xff]
    %v117 = vld [vmem:[#allocation5 + $0x8] sm:$0xff]
    %v118 = vld [vmem:[#allocation5 + $0x10] sm:$0xff]
    %v119 = vld [vmem:[#allocation5 + $0x18] sm:$0xff]
    %v120 = vld [vmem:[#allocation7] sm:$0x1]
    %v122 = vlaneseq
    %v123 = vshrl.u32 %v122, 7
    %v124 = vsub.s32 0, %v123
    %v125 = vrot.slane %v120, %v124
    %vm127 = vcmask 261120
    %v129 = vsel %vm127, %v114, 0
    %v132 = vsel %vm127, %v115, 0
    %134 = vmatprep.subr.mxu0 0.0
    %135 = vmatpush1.msra.mxu0 %v116
    %136 = vmatprep.subr.mxu0 0.0
    %137 = vmatpush1.msra.mxu0 %v117
    %138 = vmatprep.subr.mxu0 0.0
    %139 = vmatpush1.msra.mxu0 %v118
    %140 = vmatprep.subr.mxu0 0.0
    %141 = vmatpush1.msra.mxu0 %v119
    %142 = vmatprep.subr.mxu0 0.0
    %143 = vmatpush1.msra.mxu0 0.0
    %144 = vmatprep.subr.mxu0 0.0
    %145 = vmatpush1.msra.mxu0 0.0
    %146 = vmatprep.subr.mxu0 0.0
    %147 = vmatpush1.msra.mxu0 0.0
    %148 = vmatprep.subr.mxu0 0.0
    %149 = vmatpush1.msra.mxu0 0.0
    %150 = vmatprep.subr.mxu0 0.0
    %151 = vmatpush1.msra.mxu0 0.0
    %152 = vmatprep.subr.mxu0 0.0
    %153 = vmatpush1.msra.mxu0 0.0
    %154 = vmatprep.subr.mxu0 0.0
    %155 = vmatpush1.msra.mxu0 0.0
    %156 = vmatprep.subr.mxu0 0.0
    %157 = vmatpush1.msra.mxu0 0.0
    %158 = vmatprep.subr.mxu0 0.0
    %159 = vmatpush1.msra.mxu0 0.0
    %160 = vmatprep.subr.mxu0 0.0
    %161 = vmatpush1.msra.mxu0 0.0
    %162 = vmatprep.subr.mxu0 0.0
    %163 = vmatpush1.msra.mxu0 0.0
    %164 = vmatprep.subr.mxu0 0.0
    %165 = vmatpush1.msra.mxu0 0.0
    %166 = vmatprep.subr.mxu0 0.0
    %167 = vmatpush1.msra.mxu0 0.0
    %168 = vmatprep.subr.mxu0 0.0
    %169 = vmatpush1.msra.mxu0 0.0
    %170 = vmatprep.subr.mxu0 0.0
    %171 = vmatpush1.msra.mxu0 0.0
    %172 = vmatprep.subr.mxu0 0.0
    %173 = vmatpush1.msra.mxu0 0.0
    %174 = vmatprep.subr.mxu0 0.0
    %175 = vmatpush1.msra.mxu0 0.0
    %176 = vmatprep.subr.mxu0 0.0
    %177 = vmatpush1.msra.mxu0 0.0
    %178 = vmatprep.subr.mxu0 0.0
    %179 = vmatpush1.msra.mxu0 0.0
    %180 = vmatprep.subr.mxu0 0.0
    %181 = vmatpush1.msra.mxu0 0.0
    %182 = vmatprep.subr.mxu0 0.0
    %183 = vmatpush1.msra.mxu0 0.0
    %184 = vmatprep.subr.mxu0 0.0
    %185 = vmatpush1.msra.mxu0 0.0
    %186 = vmatprep.subr.mxu0 0.0
    %187 = vmatpush1.msra.mxu0 0.0
    %188 = vmatprep.subr.mxu0 0.0
    %189 = vmatpush1.msra.mxu0 0.0
    %190 = vmatprep.subr.mxu0 0.0
    %191 = vmatpush1.msra.mxu0 0.0
    %192 = vmatprep.subr.mxu0 0.0
    %193 = vmatpush1.msra.mxu0 0.0
    %194 = vmatprep.subr.mxu0 0.0
    %195 = vmatpush1.msra.mxu0 0.0
    %196 = vmatprep.subr.mxu0 0.0
    %197 = vmatpush1.msra.mxu0 0.0
    %198 = vmatprep.mubr.f32.mxu0 0.0
    %199 = vmatmul.mubr.f32.gmra.mrb[0].mxu0 %v129
    %v200 = vpop.f32.mrb[0].mxu0
    %v201 = vadd.f32 %v125, %v200
    %v202 = vpop.f32.mrb[0].mxu0
    %203 = vmatprep.mubr.f32.mxu0 0.0
    %204 = vmatmul.mubr.f32.gmra.mrb[0].mxu0 %v132
    %v205 = vpop.f32.mrb[0].mxu0
    %v206 = vadd.f32 %v125, %v205
    %v207 = vpop.f32.mrb[0].mxu0
    %208 = vdwg.mxu0
    %v209 = vmax.f32 %v201, 0.0
    %v210 = vmax.f32 %v206, 0.0
    %v211 = vld [vmem:[#allocation8] sm:$0xff]
    %v212 = vld [vmem:[#allocation8 + $0x8] sm:$0xff]
    %v213 = vld [vmem:[#allocation8 + $0x10] sm:$0xff]
    %v214 = vld [vmem:[#allocation8 + $0x18] sm:$0xff]
    %v215 = vld [vmem:[#allocation8 + $0x20] sm:$0xff]
    %v216 = vld [vmem:[#allocation8 + $0x28] sm:$0xff]
    %v217 = vld [vmem:[#allocation8 + $0x30] sm:$0xff]
    %v218 = vld [vmem:[#allocation8 + $0x38] sm:$0xff]
    %v219 = vld [vmem:[#allocation10] sm:$0x1]
    %v221 = vlaneseq
    %v222 = vshrl.u32 %v221, 7
    %v223 = vsub.s32 0, %v222
    %v224 = vrot.slane %v219, %v223
    %vm226 = vcmask 523264
    %v228 = vsel %vm226, %v209, 0
    %v231 = vsel %vm226, %v210, 0
    %233 = vmatprep.subr.mxu0 0.0
    %234 = vmatpush1.msra.mxu0 %v211
    %235 = vmatprep.subr.mxu0 0.0
    %236 = vmatpush1.msra.mxu0 %v212
    %237 = vmatprep.subr.mxu0 0.0
    %238 = vmatpush1.msra.mxu0 %v213
    %239 = vmatprep.subr.mxu0 0.0
    %240 = vmatpush1.msra.mxu0 %v214
    %241 = vmatprep.subr.mxu0 0.0
    %242 = vmatpush1.msra.mxu0 %v215
    %243 = vmatprep.subr.mxu0 0.0
    %244 = vmatpush1.msra.mxu0 %v216
    %245 = vmatprep.subr.mxu0 0.0
    %246 = vmatpush1.msra.mxu0 %v217
    %247 = vmatprep.subr.mxu0 0.0
    %248 = vmatpush1.msra.mxu0 %v218
    %249 = vmatprep.subr.mxu0 0.0
    %250 = vmatpush1.msra.mxu0 0.0
    %251 = vmatprep.subr.mxu0 0.0
    %252 = vmatpush1.msra.mxu0 0.0
    %253 = vmatprep.subr.mxu0 0.0
    %254 = vmatpush1.msra.mxu0 0.0
    %255 = vmatprep.subr.mxu0 0.0
    %256 = vmatpush1.msra.mxu0 0.0
    %257 = vmatprep.subr.mxu0 0.0
    %258 = vmatpush1.msra.mxu0 0.0
    %259 = vmatprep.subr.mxu0 0.0
    %260 = vmatpush1.msra.mxu0 0.0
    %261 = vmatprep.subr.mxu0 0.0
    %262 = vmatpush1.msra.mxu0 0.0
    %263 = vmatprep.subr.mxu0 0.0
    %264 = vmatpush1.msra.mxu0 0.0
    %265 = vmatprep.subr.mxu0 0.0
    %266 = vmatpush1.msra.mxu0 0.0
    %267 = vmatprep.subr.mxu0 0.0
    %268 = vmatpush1.msra.mxu0 0.0
    %269 = vmatprep.subr.mxu0 0.0
    %270 = vmatpush1.msra.mxu0 0.0
    %271 = vmatprep.subr.mxu0 0.0
    %272 = vmatpush1.msra.mxu0 0.0
    %273 = vmatprep.subr.mxu0 0.0
    %274 = vmatpush1.msra.mxu0 0.0
    %275 = vmatprep.subr.mxu0 0.0
    %276 = vmatpush1.msra.mxu0 0.0
    %277 = vmatprep.subr.mxu0 0.0
    %278 = vmatpush1.msra.mxu0 0.0
    %279 = vmatprep.subr.mxu0 0.0
    %280 = vmatpush1.msra.mxu0 0.0
    %281 = vmatprep.subr.mxu0 0.0
    %282 = vmatpush1.msra.mxu0 0.0
    %283 = vmatprep.subr.mxu0 0.0
    %284 = vmatpush1.msra.mxu0 0.0
    %285 = vmatprep.subr.mxu0 0.0
    %286 = vmatpush1.msra.mxu0 0.0
    %287 = vmatprep.subr.mxu0 0.0
    %288 = vmatpush1.msra.mxu0 0.0
    %289 = vmatprep.subr.mxu0 0.0
    %290 = vmatpush1.msra.mxu0 0.0
    %291 = vmatprep.subr.mxu0 0.0
    %292 = vmatpush1.msra.mxu0 0.0
    %293 = vmatprep.subr.mxu0 0.0
    %294 = vmatpush1.msra.mxu0 0.0
    %295 = vmatprep.subr.mxu0 0.0
    %296 = vmatpush1.msra.mxu0 0.0
    %297 = vmatprep.mubr.f32.mxu0 0.0
    %298 = vmatmul.mubr.f32.gmra.mrb[0].mxu0 %v228
    %v299 = vpop.f32.mrb[0].mxu0
    %v300 = vadd.f32 %v224, %v299
    %v301 = vpop.f32.mrb[0].mxu0
    %302 = vmatprep.mubr.f32.mxu0 0.0
    %303 = vmatmul.mubr.f32.gmra.mrb[0].mxu0 %v231
    %v304 = vpop.f32.mrb[0].mxu0
    %v305 = vadd.f32 %v224, %v304
    %v306 = vpop.f32.mrb[0].mxu0
    %307 = vdwg.mxu0
    %v308 = vadd.f32 %v300, %v114
    %v309 = vadd.f32 %v305, %v115
    %v310 = vld [vmem:[#allocation11] sm:$0x1]
    %v311 = vld [vmem:[#allocation13] sm:$0x1]
    %v312 = vsel %vm127, %v308, 0.0
    %313 = vadd.xlane.f32.xlu0 %v312
    %v314 = vpop.xlane.xlu0 %313
    %v315 = vsel %vm127, %v309, 0.0
    %316 = vadd.xlane.f32.xlu0 %v315
    %v317 = vpop.xlane.xlu0 %316
    %v318 = vrcp.pop 32.0
    %v319 = vmul.f32 %v314, %v318
    %v320 = vmul.f32 %v317, %v318
    %v321 = vsub.f32 %v308, %v319
    %v322 = vsub.f32 %v309, %v320
    %v323 = vmul.f32 %v321, %v321
    %v324 = vmul.f32 %v322, %v322
    %v325 = vsel %vm127, %v323, 0.0
    %326 = vadd.xlane.f32.xlu0 %v325
    %v327 = vpop.xlane.xlu0 %326
    %v328 = vsel %vm127, %v324, 0.0
    %329 = vadd.xlane.f32.xlu0 %v328
    %v330 = vpop.xlane.xlu0 %329
    %v331 = vmul.f32 %v327, %v318
    %v332 = vmul.f32 %v330, %v318
    %v333 = vadd.f32 %v331, 1e-05
    %v334 = vadd.f32 %v332, 1e-05
    %v335 = vrsqrt.pop %v333
    %v336 = vrsqrt.pop %v334
    %v338 = vlaneseq
    %v339 = vshrl.u32 %v338, 7
    %v340 = vsub.s32 0, %v339
    %v341 = vrot.slane %v310, %v340
    %v343 = vmul.f32 %v335, %v341
    %v344 = vmul.f32 %v336, %v341
    %v345 = vmul.f32 %v321, %v343
    %v346 = vmul.f32 %v322, %v344
    %v348 = vlaneseq
    %v349 = vshrl.u32 %v348, 7
    %v350 = vsub.s32 0, %v349
    %v351 = vrot.slane %v311, %v350
    %v353 = vadd.f32 %v345, %v351
    %v354 = vadd.f32 %v346, %v351
    %355 = vst.msk [vmem:[#allocation14] sm:$0xff] %vm127, %v353
    %356 = vst.msk [vmem:[#allocation14 + $0x8] sm:$0xff] %vm127, %v354
    // Predicated region
    $region58: #{tpu_custom_call.1} parent=1 // pred_check
      _
    $region59: #{tpu_custom_call.1} parent=1 // pred_check_branch
      %358 = sbr.rel (0) target = $region61
    $region60: #{tpu_custom_call.1} parent=1 // pred_region
      %s360 = ssub.s32 256, 256
      %361 = vsyncadd [#allocation4], %s360
      %s362 = sshll.u32 [#allocation14], 4
      %s363 = int_to_ptr.vmem [resolvable:$true] %s362
      %368 = dma.vmem_to_hbm [thread:$0]  %s363, 256, %s7, [#allocation4], 128, 128, 8
    $region61: #{tpu_custom_call.1} parent=1 // pred_fallthru
      _
    // Predicated region
    $region62: #{tpu_custom_call.1} parent=1 // pred_check
      _
    $region63: #{tpu_custom_call.1} parent=1 // pred_check_branch
      %370 = sbr.rel (0) target = $region65
    $region64: #{tpu_custom_call.1} parent=1 // pred_region
      %371 = dma.done [#allocation4], 256
    $region65: #{tpu_custom_call.1} parent=1 // pred_fallthru
      _
    %372 = vsyncpa [#allocation3], 1
    %373 = vsyncpa [#allocation6], 1
    %374 = vsyncpa [#allocation9], 1
    %375 = vsyncpa [#allocation12], 1
    %376 = vsyncpa [#allocation4], 1

</llo_original>
